<compile_context>
chip_gen: v7x
topology: tpu7x:2x2x1
jax: 0.10.0
libtpu: 0.0.40
codegen_flags: <defaults>
</compile_context>

<pallas_src>
import math

import jax
import jax.numpy as jnp
from jax.experimental import pallas as pl
from jax.experimental.pallas import tpu as pltpu

_HALF_LOG_2PI = 0.5 * math.log(2.0 * math.pi)


def _bayesian_kernel(prior_ref, x_ref, wt_ref, b_ref,
                     post_mean_ref, post_std_ref, noise_ref,
                     out_ref, kl_ref):
    # ---- hot path 1: linear layer + sigmoid (MXU + EUP) ------------------
    # wt_ref is pre-transposed to (input_dim, out_pad): feeds the MXU directly
    # (no in-kernel XLU transpose); out_pad is a multiple of 128 so the sigmoid
    # store is an unmasked, lane-dense vst. Padded columns hold sigmoid(0)=0.5
    # and are sliced off in the wrapper.
    logits = jnp.dot(x_ref[...], wt_ref[...],
                     preferred_element_type=jnp.float32) + b_ref[...]
    out_ref[...] = jax.nn.sigmoid(logits)

    # ---- hot path 2: reparameterized sample + fused KL -------------------
    # iid prior comes in as SMEM scalars, pre-reduced in the wrapper:
    #   prior_ref = [prior_mean, 1/prior_std, log(prior_std)]
    prior_mean = prior_ref[0]
    inv_prior = prior_ref[1]
    log_prior = prior_ref[2]

    post_std = post_std_ref[...]
    noise = noise_ref[...]
    weight = post_mean_ref[...] + post_std * noise        # reparameterized sample
    z_prior = (weight - prior_mean) * inv_prior

    # log q(w) - log p(w): z_post == noise exactly and the -0.5*log(2*pi)
    # constants cancel, leaving ONE transcendental (log post_std) per element.
    kl_elem = (-0.5 * (noise * noise - z_prior * z_prior)
               - jnp.log(post_std) + log_prior)
    kl_ref[0, 0] = jnp.sum(kl_elem)                        # one XLU reduction


# ----------------------------------------------------------------------------
# One-time "model state" preparation (hoisted out of the per-forward path).
# ----------------------------------------------------------------------------
def prepare_linear_params(fc_w, fc_b):
    """Transpose + lane-pad the fc weight/bias once (layout plumbing)."""
    output_dim, input_dim = fc_w.shape
    out_pad = pl.cdiv(output_dim, 128) * 128
    w_t = jnp.zeros((input_dim, out_pad), jnp.float32).at[:, :output_dim].set(fc_w.T)
    b_p = jnp.zeros((1, out_pad), jnp.float32).at[:, :output_dim].set(
        fc_b.reshape(1, output_dim))
    return w_t, b_p


def prepare_prior(prior_mean, prior_std):
    """The module's prior is iid (zeros_like / ones_like, requires_grad=False);
    reduce it to three SMEM scalars: [mean, 1/std, log(std)]."""
    pm = jnp.asarray(prior_mean, jnp.float32).reshape(-1)[0]
    ps = jnp.asarray(prior_std, jnp.float32).reshape(-1)[0]
    return jnp.stack([pm, 1.0 / ps, jnp.log(ps)]).astype(jnp.float32)


def _padded_f32_bytes(shape):
    """f32 bytes of an array padded to (8, 128) tiles on its last two dims."""
    if len(shape) == 1:
        shape = (1,) + tuple(shape)
    rows = pl.cdiv(shape[-2], 8) * 8
    cols = pl.cdiv(shape[-1], 128) * 128
    lead = 1
    for d in shape[:-2]:
        lead *= d
    return 4 * lead * rows * cols


def bayesian_nn_forward(x, w_t, b_p, post_mean, post_std, prior_scalars, noise,
                        *, output_dim):
    """Returns (sigmoid(x @ fc_w.T + fc_b), log_posterior - log_prior)."""
    batch, input_dim = x.shape
    out_pad = w_t.shape[1]
    n_param = post_mean.size

    vmem = pl.BlockSpec(memory_space=pltpu.MemorySpace.VMEM)
    smem = pl.BlockSpec(memory_space=pltpu.MemorySpace.SMEM)

    # VMEM budget derived from the actual (tile-padded) footprint + headroom so
    # the kernel is portable to v7x's 64 MiB VMEM.
    footprint = sum(_padded_f32_bytes(s) for s in (
        x.shape, w_t.shape, b_p.shape, post_mean.shape, post_std.shape,
        noise.shape, (batch, out_pad)))
    vmem_limit = max(4 * footprint, 2 * 1024 * 1024)

    cost = pl.CostEstimate(
        flops=2 * batch * input_dim * out_pad + 8 * n_param,
        transcendentals=batch * out_pad + n_param,            # sigmoid + 1 log/param
        bytes_accessed=4 * (x.size + w_t.size + b_p.size + 3 * n_param
                            + 3 + batch * out_pad + 1),
    )

    out_p, kl = pl.pallas_call(
        _bayesian_kernel,
        out_shape=(
            jax.ShapeDtypeStruct((batch, out_pad), jnp.float32),
            jax.ShapeDtypeStruct((1, 1), jnp.float32),
        ),
        in_specs=[smem, vmem, vmem, vmem, vmem, vmem, vmem],
        out_specs=(vmem, smem),
        compiler_params=pltpu.CompilerParams(vmem_limit_bytes=vmem_limit),
        cost_estimate=cost,
    )(prior_scalars, x, w_t, b_p, post_mean, post_std, noise)

    return out_p[:, :output_dim], kl[0, 0]


if __name__ == "__main__":
    input_dim = 32
    output_dim = 16
    batch = 8

    key = jax.random.PRNGKey(0)
    k_x, k_w, k_b, k_pm, k_ps, k_noise = jax.random.split(key, 6)

    # Deterministic "parameters" matching the module's __init__ shapes.
    x = jax.random.normal(k_x, (batch, input_dim), dtype=jnp.float32)
    fc_w = jax.random.normal(k_w, (output_dim, input_dim), dtype=jnp.float32) * 0.1
    fc_b = jax.random.normal(k_b, (output_dim,), dtype=jnp.float32) * 0.1
    prior_mean = jnp.zeros((output_dim, input_dim), dtype=jnp.float32)   # zeros_like
    prior_std = jnp.ones((output_dim, input_dim), dtype=jnp.float32)     # ones_like
    posterior_mean = jax.random.normal(k_pm, (output_dim, input_dim), dtype=jnp.float32)
    posterior_std = jnp.exp(jax.random.normal(k_ps, (output_dim, input_dim),
                                              dtype=jnp.float32))
    # torch.randn_like(posterior_std) in forward -> deterministic noise here.
    noise = jax.random.normal(k_noise, (output_dim, input_dim), dtype=jnp.float32)

    # One-time layout / prior prep (model state), NOT paid per forward call.
    w_t, b_p = prepare_linear_params(fc_w, fc_b)
    prior_scalars = prepare_prior(prior_mean, prior_std)

    fwd = jax.jit(bayesian_nn_forward, static_argnames=("output_dim",))
    out, kl = fwd(x, w_t, b_p, posterior_mean, posterior_std, prior_scalars, noise,
                  output_dim=output_dim)
    jax.block_until_ready((out, kl))

    # Pure-JAX reference (same math as the PyTorch module, exact divides/logs).
    ref_out = jax.nn.sigmoid(x @ fc_w.T + fc_b)
    weight = posterior_mean + posterior_std * noise

    def _ref_lp(w, mu, sigma):
        return jnp.sum(-0.5 * ((w - mu) / sigma) ** 2 - jnp.log(sigma) - _HALF_LOG_2PI)

    ref_kl = (_ref_lp(weight, posterior_mean, posterior_std)
              - _ref_lp(weight, prior_mean, prior_std))

    assert out.shape == (batch, output_dim)
    assert jnp.allclose(out, ref_out, atol=1e-5, rtol=1e-5)
    # Exact scalar 1/prior_std (no approx reciprocal anymore) -> tighter tolerance.
    assert jnp.allclose(kl, ref_kl, atol=5e-2, rtol=5e-4)
    print("KERNEL_OK")
</pallas_src>

<mosaic_0001>
module attributes {stable_mosaic.version = 11 : i64} {
  func.func @_bayesian_kernel(%arg0: memref<3xf32, #tpu.memory_space<smem>>, %arg1: memref<8x32xf32, #tpu.memory_space<vmem>>, %arg2: memref<32x128xf32, #tpu.memory_space<vmem>>, %arg3: memref<1x128xf32, #tpu.memory_space<vmem>>, %arg4: memref<16x32xf32, #tpu.memory_space<vmem>>, %arg5: memref<16x32xf32, #tpu.memory_space<vmem>>, %arg6: memref<16x32xf32, #tpu.memory_space<vmem>>, %arg7: memref<8x128xf32, #tpu.memory_space<vmem>>, %arg8: memref<1x1xf32, #tpu.memory_space<smem>>) attributes {dimension_semantics = [], scalar_prefetch = 0 : i64, scratch_operands = 0 : i64, tpu.core_type = #tpu.core_type<tc>} {
    %c0 = arith.constant 0 : index
    %c0_0 = arith.constant 0 : index
    %0 = vector.load %arg1[%c0, %c0_0] : memref<8x32xf32, #tpu.memory_space<vmem>>, vector<8x32xf32>
    %c0_1 = arith.constant 0 : index
    %c0_2 = arith.constant 0 : index
    %1 = vector.load %arg2[%c0_1, %c0_2] : memref<32x128xf32, #tpu.memory_space<vmem>>, vector<32x128xf32>
    %cst = arith.constant dense<0.000000e+00> : vector<8x128xf32>
    %2 = tpu.matmul %0, %1, %cst {dimension_numbers = #tpu.dot_dimension_numbers<[1], [0], [0], [1], [0, 0, 1, 1], [], []>} : vector<8x32xf32>, vector<32x128xf32>, vector<8x128xf32> -> vector<8x128xf32>
    %c0_3 = arith.constant 0 : index
    %c0_4 = arith.constant 0 : index
    %3 = vector.load %arg3[%c0_3, %c0_4] : memref<1x128xf32, #tpu.memory_space<vmem>>, vector<1x128xf32>
    %4 = vector.broadcast %3 : vector<1x128xf32> to vector<8x128xf32>
    %5 = arith.addf %2, %4 : vector<8x128xf32>
    %6 = arith.negf %5 : vector<8x128xf32>
    %7 = math.exp %6 : vector<8x128xf32>
    %cst_5 = arith.constant 1.000000e+00 : f32
    %8 = vector.broadcast %cst_5 : f32 to vector<8x128xf32>
    %9 = arith.addf %8, %7 : vector<8x128xf32>
    %10 = arith.divf %8, %9 : vector<8x128xf32>
    %c0_6 = arith.constant 0 : index
    %c0_7 = arith.constant 0 : index
    %11 = vector.load %arg7[%c0_6, %c0_7] : memref<8x128xf32, #tpu.memory_space<vmem>>, vector<8x128xf32>
    tpu.vector_store %arg7[%c0_6, %c0_7], %10 {strides = array<i32>} : memref<8x128xf32, #tpu.memory_space<vmem>>, vector<8x128xf32>,
    %c0_8 = arith.constant 0 : index
    %12 = memref.load %arg0[%c0_8] : memref<3xf32, #tpu.memory_space<smem>>
    %c1 = arith.constant 1 : index
    %13 = memref.load %arg0[%c1] : memref<3xf32, #tpu.memory_space<smem>>
    %c2 = arith.constant 2 : index
    %14 = memref.load %arg0[%c2] : memref<3xf32, #tpu.memory_space<smem>>
    %c0_9 = arith.constant 0 : index
    %c0_10 = arith.constant 0 : index
    %15 = vector.load %arg5[%c0_9, %c0_10] : memref<16x32xf32, #tpu.memory_space<vmem>>, vector<16x32xf32>
    %c0_11 = arith.constant 0 : index
    %c0_12 = arith.constant 0 : index
    %16 = vector.load %arg6[%c0_11, %c0_12] : memref<16x32xf32, #tpu.memory_space<vmem>>, vector<16x32xf32>
    %c0_13 = arith.constant 0 : index
    %c0_14 = arith.constant 0 : index
    %17 = vector.load %arg4[%c0_13, %c0_14] : memref<16x32xf32, #tpu.memory_space<vmem>>, vector<16x32xf32>
    %18 = arith.mulf %15, %16 : vector<16x32xf32>
    %19 = arith.addf %17, %18 : vector<16x32xf32>
    %20 = vector.broadcast %12 : f32 to vector<16x32xf32>
    %21 = arith.subf %19, %20 : vector<16x32xf32>
    %22 = vector.broadcast %13 : f32 to vector<16x32xf32>
    %23 = arith.mulf %21, %22 : vector<16x32xf32>
    %24 = arith.mulf %16, %16 : vector<16x32xf32>
    %25 = arith.mulf %23, %23 : vector<16x32xf32>
    %26 = arith.subf %24, %25 : vector<16x32xf32>
    %cst_15 = arith.constant -5.000000e-01 : f32
    %27 = vector.broadcast %cst_15 : f32 to vector<16x32xf32>
    %28 = arith.mulf %27, %26 : vector<16x32xf32>
    %29 = math.log %15 : vector<16x32xf32>
    %30 = arith.subf %28, %29 : vector<16x32xf32>
    %31 = vector.broadcast %14 : f32 to vector<16x32xf32>
    %32 = arith.addf %30, %31 : vector<16x32xf32>
    %33 = vector.shape_cast %32 : vector<16x32xf32> to vector<1x16x32xf32>
    %cst_16 = arith.constant dense<0.000000e+00> : vector<1xf32>
    %34 = vector.multi_reduction <add>, %33, %cst_16 [1, 2] : vector<1x16x32xf32> to vector<1xf32>
    %35 = vector.shape_cast %34 : vector<1xf32> to vector<1x1x1xf32>
    %36 = vector.extract %35[0, 0, 0] : f32 from vector<1x1x1xf32>
    %c0_17 = arith.constant 0 : index
    %c0_18 = arith.constant 0 : index
    %37 = memref.load %arg8[%c0_17, %c0_18] : memref<1x1xf32, #tpu.memory_space<smem>>
    memref.store %36, %arg8[%c0_17, %c0_18] : memref<1x1xf32, #tpu.memory_space<smem>>
    return
  }
}

</mosaic_0001>

<llo_original>
// kernel: bayesian_nn_forward.1
$region0: #{bayesian_nn_forward.1}
  #allocation0 [shape = 'u32[]', space=smem, size = 0x4, offset = 0x4, fixed_abs, tag = 'smem constant byte address 0x4 - core index']
  #allocation1 [shape = 'u32[144,128]{1,0:T(1,128)}', space=vmem, size = 0x12000, scoped, tag = 'internal scratch']
  %s0 = inlined_call_operand.vmem [shape: f32[3], index: 0, kind: input, shape index: {}]
  %s1 = inlined_call_operand.hbm [shape: f32[8,32], index: 1, kind: input, shape index: {}]
  %s2 = inlined_call_operand.hbm [shape: f32[32,128], index: 2, kind: input, shape index: {}]
  %s3 = inlined_call_operand.vmem [shape: f32[1,128], index: 3, kind: input, shape index: {}]
  %s4 = inlined_call_operand.hbm [shape: f32[16,32], index: 4, kind: input, shape index: {}]
  %s5 = inlined_call_operand.hbm [shape: f32[16,32], index: 5, kind: input, shape index: {}]
  %s6 = inlined_call_operand.vmem [shape: f32[16,32], index: 6, kind: input, shape index: {}]
  %s7 = inlined_call_operand.hbm [shape: f32[8,128], index: 7, kind: output, shape index: {0}]
  %s8 = inlined_call_operand.hbm [shape: f32[1,1], index: 8, kind: output, shape index: {1}]
  %9 = xla_tuple %s7, %s8
  %s10 = sld [smem:[#allocation0]]
  $region66: #{bayesian_nn_forward.1} parent=0
    _
  %s12 = ssub.s32 1, %s10
  %s13 = scalar_select 0, %s12, %s10
  $region1: #{bayesian_nn_forward.1} parent=0
    #allocation2 [shape = 'u8[512]{0}', space=smem, size = 0x200, scoped, tag = 'input window, operand 0, single buffered']
    #allocation3 [shape = 's32[1]{0}', space=sflag, size = 0x4, scoped, tag = 'scoped memory for bayesian_nn_forward.1']
    #allocation4 [shape = 's32[1]{0}', space=sflag, size = 0x4, scoped, tag = 'scoped memory for bayesian_nn_forward.1']
    #allocation5 [shape = 's32[1]{0}', space=sflag, size = 0x4, scoped, tag = 'scoped memory for bayesian_nn_forward.1']
    #allocation6 [shape = 's32[1]{0}', space=sflag, size = 0x4, scoped, tag = 'scoped memory for bayesian_nn_forward.1']
    #allocation7 [shape = 'u8[4096]{0}', space=vmem, size = 0x1000, scoped, tag = 'input window, operand 1, single buffered']
    #allocation8 [shape = 'u8[16384]{0}', space=vmem, size = 0x4000, scoped, tag = 'input window, operand 2, single buffered']
    #allocation9 [shape = 's32[1]{0}', space=sflag, size = 0x4, scoped, tag = 'scoped memory for bayesian_nn_forward.1']
    #allocation10 [shape = 'u8[8192]{0}', space=vmem, size = 0x2000, scoped, tag = 'input window, operand 4, single buffered']
    #allocation11 [shape = 'u8[8192]{0}', space=vmem, size = 0x2000, scoped, tag = 'input window, operand 5, single buffered']
    #allocation12 [shape = 's32[1]{0}', space=sflag, size = 0x4, scoped, tag = 'scoped memory for bayesian_nn_forward.1']
    #allocation13 [shape = 'u8[4096]{0}', space=vmem, size = 0x1000, scoped, tag = 'output window, operand 0, single buffered']
    #allocation14 [shape = 'u8[512]{0}', space=smem, size = 0x200, scoped, tag = 'output window, operand 1, single buffered']
    %14 = vsyncpa [#allocation6], 0
    %15 = vsyncpa [#allocation3], 0
    %16 = vsyncpa [#allocation9], 0
    %17 = vsyncpa [#allocation12], 0
    %18 = vsyncpa [#allocation4], 0
    %19 = vsyncpa [#allocation5], 0
    // Predicated region
    $region2: #{bayesian_nn_forward.1} parent=1 // pred_check
      _
    $region3: #{bayesian_nn_forward.1} parent=1 // pred_check_branch
      %21 = sbr.rel (0) target = $region5
    $region4: #{bayesian_nn_forward.1} parent=1 // pred_region
      %s23 = ssub.s32 16, 16
      %24 = vsyncadd [#allocation6], %s23
      %s26 = sshll.u32 %s0, 4
      %s27 = int_to_ptr.vmem [resolvable:$true] %s26
      %29 = dma.vmem_to_smem %s27, 16, [#allocation2], [#allocation6]
    $region5: #{bayesian_nn_forward.1} parent=1 // pred_fallthru
      _
    // Predicated region
    $region6: #{bayesian_nn_forward.1} parent=1 // pred_check
      _
    $region7: #{bayesian_nn_forward.1} parent=1 // pred_check_branch
      %31 = sbr.rel (0) target = $region9
    $region8: #{bayesian_nn_forward.1} parent=1 // pred_region
      %s33 = ssub.s32 128, 128
      %34 = vsyncadd [#allocation3], %s33
      %s36 = sshll.u32 [#allocation7], 4
      %s37 = int_to_ptr.vmem [resolvable:$true] %s36
      %39 = dma.hbm_to_vmem [thread:$0]  %s1, 128, %s37, [#allocation3]
    $region9: #{bayesian_nn_forward.1} parent=1 // pred_fallthru
      _
    // Predicated region
    $region10: #{bayesian_nn_forward.1} parent=1 // pred_check
      _
    $region11: #{bayesian_nn_forward.1} parent=1 // pred_check_branch
      %41 = sbr.rel (0) target = $region13
    $region12: #{bayesian_nn_forward.1} parent=1 // pred_region
      %s43 = ssub.s32 512, 512
      %44 = vsyncadd [#allocation9], %s43
      %s45 = sshll.u32 [#allocation8], 4
      %s46 = int_to_ptr.vmem [resolvable:$true] %s45
      %51 = dma.hbm_to_vmem [thread:$0]  %s2, 512, %s46, [#allocation9], 128, 128, 8
    $region13: #{bayesian_nn_forward.1} parent=1 // pred_fallthru
      _
    // Predicated region
    $region14: #{bayesian_nn_forward.1} parent=1 // pred_check
      _
    $region15: #{bayesian_nn_forward.1} parent=1 // pred_check_branch
      %53 = sbr.rel (0) target = $region17
    $region16: #{bayesian_nn_forward.1} parent=1 // pred_region
      _
    $region17: #{bayesian_nn_forward.1} parent=1 // pred_fallthru
      _
    // Predicated region
    $region18: #{bayesian_nn_forward.1} parent=1 // pred_check
      _
    $region19: #{bayesian_nn_forward.1} parent=1 // pred_check_branch
      %55 = sbr.rel (0) target = $region21
    $region20: #{bayesian_nn_forward.1} parent=1 // pred_region
      %s57 = ssub.s32 256, 256
      %58 = vsyncadd [#allocation9], %s57
      %s59 = sshll.u32 [#allocation10], 4
      %s60 = int_to_ptr.vmem [resolvable:$true] %s59
      %65 = dma.hbm_to_vmem [thread:$0]  %s4, 256, %s60, [#allocation9], 128, 128, 8
    $region21: #{bayesian_nn_forward.1} parent=1 // pred_fallthru
      _
    // Predicated region
    $region22: #{bayesian_nn_forward.1} parent=1 // pred_check
      _
    $region23: #{bayesian_nn_forward.1} parent=1 // pred_check_branch
      %67 = sbr.rel (0) target = $region25
    $region24: #{bayesian_nn_forward.1} parent=1 // pred_region
      %s69 = ssub.s32 256, 256
      %70 = vsyncadd [#allocation12], %s69
      %s71 = sshll.u32 [#allocation11], 4
      %s72 = int_to_ptr.vmem [resolvable:$true] %s71
      %77 = dma.hbm_to_vmem [thread:$0]  %s5, 256, %s72, [#allocation12], 128, 128, 8
    $region25: #{bayesian_nn_forward.1} parent=1 // pred_fallthru
      _
    // Predicated region
    $region26: #{bayesian_nn_forward.1} parent=1 // pred_check
      _
    $region27: #{bayesian_nn_forward.1} parent=1 // pred_check_branch
      %79 = sbr.rel (0) target = $region29
    $region28: #{bayesian_nn_forward.1} parent=1 // pred_region
      _
    $region29: #{bayesian_nn_forward.1} parent=1 // pred_fallthru
      _
    // Predicated region
    $region30: #{bayesian_nn_forward.1} parent=1 // pred_check
      _
    $region31: #{bayesian_nn_forward.1} parent=1 // pred_check_branch
      %81 = sbr.rel (0) target = $region33
    $region32: #{bayesian_nn_forward.1} parent=1 // pred_region
      %82 = dma.done [#allocation6], 16
    $region33: #{bayesian_nn_forward.1} parent=1 // pred_fallthru
      _
    // Predicated region
    $region34: #{bayesian_nn_forward.1} parent=1 // pred_check
      _
    $region35: #{bayesian_nn_forward.1} parent=1 // pred_check_branch
      %84 = sbr.rel (0) target = $region37
    $region36: #{bayesian_nn_forward.1} parent=1 // pred_region
      %85 = dma.done [#allocation3], 128
    $region37: #{bayesian_nn_forward.1} parent=1 // pred_fallthru
      _
    // Predicated region
    $region38: #{bayesian_nn_forward.1} parent=1 // pred_check
      _
    $region39: #{bayesian_nn_forward.1} parent=1 // pred_check_branch
      %87 = sbr.rel (0) target = $region41
    $region40: #{bayesian_nn_forward.1} parent=1 // pred_region
      %88 = dma.done [#allocation9], 512
    $region41: #{bayesian_nn_forward.1} parent=1 // pred_fallthru
      _
    // Predicated region
    $region42: #{bayesian_nn_forward.1} parent=1 // pred_check
      _
    $region43: #{bayesian_nn_forward.1} parent=1 // pred_check_branch
      %90 = sbr.rel (0) target = $region45
    $region44: #{bayesian_nn_forward.1} parent=1 // pred_region
      %91 = dma.done [#allocation9], 256
    $region45: #{bayesian_nn_forward.1} parent=1 // pred_fallthru
      _
    // Predicated region
    $region46: #{bayesian_nn_forward.1} parent=1 // pred_check
      _
    $region47: #{bayesian_nn_forward.1} parent=1 // pred_check_branch
      %93 = sbr.rel (0) target = $region49
    $region48: #{bayesian_nn_forward.1} parent=1 // pred_region
      %94 = dma.done [#allocation12], 256
    $region49: #{bayesian_nn_forward.1} parent=1 // pred_fallthru
      _
    %95 = sfence
    %v96 = vld [vmem:[#allocation7] sm:$0xff]
    %v97 = vld [vmem:[#allocation8] sm:$0xff]
    %v98 = vld [vmem:[#allocation8 + $0x8] sm:$0xff]
    %v99 = vld [vmem:[#allocation8 + $0x10] sm:$0xff]
    %v100 = vld [vmem:[#allocation8 + $0x18] sm:$0xff]
    %v101 = vld [vmem:[%s3] sm:$0x1]
    %v103 = vlaneseq
    %v104 = vshrl.u32 %v103, 7
    %v105 = vsub.s32 0, %v104
    %v106 = vrot.slane %v101, %v105
    %vm108 = vcmask 261120
    %v110 = vsel %vm108, %v96, 0
    %112 = vmatprep.subr.mxu0 0.0
    %113 = vmatpush1.msra.mxu0 %v97
    %114 = vmatprep.subr.mxu0 0.0
    %115 = vmatpush1.msra.mxu0 %v98
    %116 = vmatprep.subr.mxu0 0.0
    %117 = vmatpush1.msra.mxu0 %v99
    %118 = vmatprep.subr.mxu0 0.0
    %119 = vmatpush1.msra.mxu0 %v100
    %120 = vmatprep.subr.mxu0 0.0
    %121 = vmatpush1.msra.mxu0 0.0
    %122 = vmatprep.subr.mxu0 0.0
    %123 = vmatpush1.msra.mxu0 0.0
    %124 = vmatprep.subr.mxu0 0.0
    %125 = vmatpush1.msra.mxu0 0.0
    %126 = vmatprep.subr.mxu0 0.0
    %127 = vmatpush1.msra.mxu0 0.0
    %128 = vmatprep.subr.mxu0 0.0
    %129 = vmatpush1.msra.mxu0 0.0
    %130 = vmatprep.subr.mxu0 0.0
    %131 = vmatpush1.msra.mxu0 0.0
    %132 = vmatprep.subr.mxu0 0.0
    %133 = vmatpush1.msra.mxu0 0.0
    %134 = vmatprep.subr.mxu0 0.0
    %135 = vmatpush1.msra.mxu0 0.0
    %136 = vmatprep.subr.mxu0 0.0
    %137 = vmatpush1.msra.mxu0 0.0
    %138 = vmatprep.subr.mxu0 0.0
    %139 = vmatpush1.msra.mxu0 0.0
    %140 = vmatprep.subr.mxu0 0.0
    %141 = vmatpush1.msra.mxu0 0.0
    %142 = vmatprep.subr.mxu0 0.0
    %143 = vmatpush1.msra.mxu0 0.0
    %144 = vmatprep.subr.mxu0 0.0
    %145 = vmatpush1.msra.mxu0 0.0
    %146 = vmatprep.subr.mxu0 0.0
    %147 = vmatpush1.msra.mxu0 0.0
    %148 = vmatprep.subr.mxu0 0.0
    %149 = vmatpush1.msra.mxu0 0.0
    %150 = vmatprep.subr.mxu0 0.0
    %151 = vmatpush1.msra.mxu0 0.0
    %152 = vmatprep.subr.mxu0 0.0
    %153 = vmatpush1.msra.mxu0 0.0
    %154 = vmatprep.subr.mxu0 0.0
    %155 = vmatpush1.msra.mxu0 0.0
    %156 = vmatprep.subr.mxu0 0.0
    %157 = vmatpush1.msra.mxu0 0.0
    %158 = vmatprep.subr.mxu0 0.0
    %159 = vmatpush1.msra.mxu0 0.0
    %160 = vmatprep.subr.mxu0 0.0
    %161 = vmatpush1.msra.mxu0 0.0
    %162 = vmatprep.subr.mxu0 0.0
    %163 = vmatpush1.msra.mxu0 0.0
    %164 = vmatprep.subr.mxu0 0.0
    %165 = vmatpush1.msra.mxu0 0.0
    %166 = vmatprep.subr.mxu0 0.0
    %167 = vmatpush1.msra.mxu0 0.0
    %168 = vmatprep.subr.mxu0 0.0
    %169 = vmatpush1.msra.mxu0 0.0
    %170 = vmatprep.subr.mxu0 0.0
    %171 = vmatpush1.msra.mxu0 0.0
    %172 = vmatprep.subr.mxu0 0.0
    %173 = vmatpush1.msra.mxu0 0.0
    %174 = vmatprep.subr.mxu0 0.0
    %175 = vmatpush1.msra.mxu0 0.0
    %176 = vmatprep.mubr.f32.mxu0 0.0
    %177 = vmatmul.mubr.f32.gmra.mrb[0].mxu0 %v110
    %v178 = vpop.f32.mrb[0].mxu0
    %v179 = vadd.f32 %v106, %v178
    %v180 = vpop.f32.mrb[0].mxu0
    %181 = vdwg.mxu0
    %v182 = vxor.u32 %v179, 2147483648
    %v183 = vmul.f32 %v182, 1.442695
    %v184 = vpow.pop %v183
    %v185 = vadd.f32 %v184, 1.0
    %v186 = vrcp.pop %v185
    %v187 = vmul.f32 1.0, %v186
    %188 = vst [vmem:[#allocation13] sm:$0xff] %v187
    %s189 = sld [smem:[#allocation2]]
    %s190 = sld [smem:[#allocation2 + $0x1]]
    %s191 = sld [smem:[#allocation2 + $0x2]]
    %v192 = vld [vmem:[#allocation11] sm:$0xff]
    %v193 = vld [vmem:[#allocation11 + $0x8] sm:$0xff]
    %v194 = vld [vmem:[%s6] sm:$0xff]
    %v195 = vld [vmem:[%s6 + $0x8] sm:$0xff]
    %v196 = vld [vmem:[#allocation10] sm:$0xff]
    %v197 = vld [vmem:[#allocation10 + $0x8] sm:$0xff]
    %v198 = vmul.f32 %v192, %v194
    %v199 = vmul.f32 %v193, %v195
    %v200 = vadd.f32 %v196, %v198
    %v201 = vadd.f32 %v197, %v199
    %v202 = vstv %s189
    %v203 = vsub.f32 %v200, %v202
    %v204 = vsub.f32 %v201, %v202
    %v205 = vstv %s190
    %v206 = vmul.f32 %v203, %v205
    %v207 = vmul.f32 %v204, %v205
    %v208 = vmul.f32 %v194, %v194
    %v209 = vmul.f32 %v195, %v195
    %v210 = vmul.f32 %v206, %v206
    %v211 = vmul.f32 %v207, %v207
    %v212 = vsub.f32 %v208, %v210
    %v213 = vsub.f32 %v209, %v211
    %v214 = vmul.f32 %v212, -0.5
    %v215 = vmul.f32 %v213, -0.5
    %v216 = vlog2.pop %v192
    %v217 = vmul.f32 %v216, 0.6931472
    %v218 = vlog2.pop %v193
    %v219 = vmul.f32 %v218, 0.6931472
    %v220 = vsub.f32 %v214, %v217
    %v221 = vsub.f32 %v215, %v219
    %v222 = vstv %s191
    %v223 = vadd.f32 %v220, %v222
    %v224 = vadd.f32 %v221, %v222
    %v225 = vsel %vm108, %v223, 0.0
    %v226 = vsel %vm108, %v224, 0.0
    %v227 = vadd.f32 %v225, %v226
    %228 = vadd.xlane.f32.xlu0 %v227
    %v229 = vpop.xlane.xlu0 %228
    %v230 = vrot.slane %v229, 4
    %v231 = vadd.f32 %v229, %v230
    %v232 = vrot.slane %v231, 2
    %v233 = vadd.f32 %v231, %v232
    %v234 = vrot.slane %v233, 1
    %v235 = vadd.f32 %v233, %v234
    %s236 = vtos %v235
    %s237 = scalar_lea.smem [#allocation14], 0
    %238 = sst [smem:[%s237]] %s236
    // Predicated region
    $region50: #{bayesian_nn_forward.1} parent=1 // pred_check
      _
    $region51: #{bayesian_nn_forward.1} parent=1 // pred_check_branch
      %240 = sbr.rel (0) target = $region53
    $region52: #{bayesian_nn_forward.1} parent=1 // pred_region
      %s242 = ssub.s32 128, 128
      %243 = vsyncadd [#allocation4], %s242
      %s245 = sshll.u32 [#allocation13], 4
      %s246 = int_to_ptr.vmem [resolvable:$true] %s245
      %248 = dma.vmem_to_hbm [thread:$0]  %s246, 128, %s7, [#allocation4]
    $region53: #{bayesian_nn_forward.1} parent=1 // pred_fallthru
      _
    // Predicated region
    $region54: #{bayesian_nn_forward.1} parent=1 // pred_check
      _
    $region55: #{bayesian_nn_forward.1} parent=1 // pred_check_branch
      %250 = sbr.rel (0) target = $region57
    $region56: #{bayesian_nn_forward.1} parent=1 // pred_region
      %s252 = ssub.s32 16, 16
      %253 = vsyncadd [#allocation5], %s252
      %256 = dma.smem_to_hbm [#allocation14], 16, %s8, [#allocation5]
    $region57: #{bayesian_nn_forward.1} parent=1 // pred_fallthru
      _
    // Predicated region
    $region58: #{bayesian_nn_forward.1} parent=1 // pred_check
      _
    $region59: #{bayesian_nn_forward.1} parent=1 // pred_check_branch
      %258 = sbr.rel (0) target = $region61
    $region60: #{bayesian_nn_forward.1} parent=1 // pred_region
      %259 = dma.done [#allocation4], 128
    $region61: #{bayesian_nn_forward.1} parent=1 // pred_fallthru
      _
    // Predicated region
    $region62: #{bayesian_nn_forward.1} parent=1 // pred_check
      _
    $region63: #{bayesian_nn_forward.1} parent=1 // pred_check_branch
      %261 = sbr.rel (0) target = $region65
    $region64: #{bayesian_nn_forward.1} parent=1 // pred_region
      %262 = dma.done [#allocation5], 16
    $region65: #{bayesian_nn_forward.1} parent=1 // pred_fallthru
      _
    %263 = sfence
    %264 = vsyncpa [#allocation3], 1
    %265 = vsyncpa [#allocation9], 1
    %266 = vsyncpa [#allocation12], 1
    %267 = vsyncpa [#allocation4], 1
    %268 = vsyncpa [#allocation5], 1
    %269 = vsyncpa [#allocation6], 1

</llo_original>
